<compile_context>
chip_gen: v7x
topology: tpu7x:2x2x1
jax: 0.10.0
libtpu: 0.0.40
codegen_flags: <defaults>
</compile_context>

<pallas_src>
import functools

import jax
import jax.numpy as jnp
from jax import lax
from jax.experimental import pallas as pl
from jax.experimental.pallas import tpu as pltpu


def _round_up(n, m):
    return ((n + m - 1) // m) * m


def _cascade_vae_c_kernel(stage_ref, kl_ref, out_ref, *, beta_min, beta_max, tile):
    """One lane-tile of the weighted-KL sum; accumulates into the SMEM scalar."""
    k = pl.program_id(0)

    @pl.when(k == 0)
    def _init():
        out_ref[0, 0] = jnp.float32(0.0)

    stage = stage_ref[0]                                   # int32 scalar (SMEM)
    kl = kl_ref[...]                                       # [1, tile] f32 (VMEM)
    col = k * tile + lax.broadcasted_iota(jnp.int32, kl.shape, 1)
    weight = jnp.where(col <= stage,
                       jnp.float32(beta_min), jnp.float32(beta_max))
    # Padding lanes carry kl == 0, so they contribute nothing to the sum.
    out_ref[0, 0] += jnp.sum(weight * kl)


class CascadeVAEC:
    """JAX/Pallas port of the CascadeVAE-C regularizer."""

    # Lane tile per grid step (multiple of 128).  num_latent is typically tiny,
    # so the common case is a single-block grid; tiling only kicks in for very
    # large latent sizes (keeps VMEM bounded and lets BlockSpec pipeline).
    _MAX_TILE = 4096

    def __init__(self, stage_steps, beta_min=1, beta_max=10):
        self.stage_steps = int(stage_steps)
        self.beta_min = float(beta_min)
        self.beta_max = float(beta_max)

    def forward(self, data_batch, model, kl, z_mean, z_logvar, z_sampled):
        # Only `kl` (plus the stage scalar) is used by this regularizer; the
        # other tensors are intentionally not passed to the kernel (no DMA).
        del data_batch, z_mean, z_logvar, z_sampled
        num_latent = int(model.num_latent)

        stage = jnp.minimum(
            jnp.asarray(model.global_step, jnp.int32) // jnp.int32(self.stage_steps),
            jnp.int32(num_latent - 1)).astype(jnp.int32)
        if hasattr(model, "summary") and isinstance(model.summary, dict):
            model.summary["stage"] = stage   # host-side bookkeeping, as in the spec

        kl_vec = jnp.asarray(kl, jnp.float32).reshape(-1)   # [num_latent]
        n = kl_vec.shape[0]
        tile = _round_up(n, 128) if n <= self._MAX_TILE else self._MAX_TILE
        n_pad = _round_up(n, tile)
        kl_row = jnp.zeros((1, n_pad), jnp.float32).at[0, :n].set(kl_vec)
        grid = n_pad // tile

        kernel = functools.partial(
            _cascade_vae_c_kernel,
            beta_min=self.beta_min, beta_max=self.beta_max, tile=tile)

        out = pl.pallas_call(
            kernel,
            out_shape=jax.ShapeDtypeStruct((1, 1), jnp.float32),
            grid_spec=pltpu.PrefetchScalarGridSpec(
                num_scalar_prefetch=1,
                grid=(grid,),
                in_specs=[pl.BlockSpec((1, tile),
                                       lambda k, stage_ref: (0, k))],
                out_specs=pl.BlockSpec(memory_space=pltpu.MemorySpace.SMEM),
            ),
            compiler_params=pltpu.CompilerParams(
                dimension_semantics=("arbitrary",)),
        )(stage.reshape((1,)), kl_row)
        return out[0, 0]

    __call__ = forward


def _reference_forward(stage_steps, beta_min, beta_max, global_step, num_latent, kl):
    """Pure-JAX reference mirroring the PyTorch semantics."""
    stage = min(int(global_step) // int(stage_steps), int(num_latent) - 1)
    kl = jnp.asarray(kl, jnp.float32)
    weight = jnp.full(kl.shape, beta_min, dtype=jnp.float32)
    weight = weight.at[stage + 1:].set(beta_max)
    return jnp.sum(weight * kl)


class _ModelStub:
    def __init__(self, num_latent, global_step):
        self.num_latent = num_latent
        self.global_step = global_step
        self.summary = {}


if __name__ == "__main__":
    key = jax.random.PRNGKey(0)
    k1, k2, k3, k4 = jax.random.split(key, 4)

    batch, num_latent = 2, 16
    # data_batch / z_* kept for interface parity; only kl feeds the kernel.
    data_batch = jax.random.normal(k1, (batch, 4, 16, 16), dtype=jnp.float32)
    z_mean = jax.random.normal(k2, (batch, num_latent), dtype=jnp.float32)
    z_logvar = 0.1 * jax.random.normal(k3, (batch, num_latent), dtype=jnp.float32)
    z_sampled = z_mean + jnp.exp(0.5 * z_logvar) * jax.random.normal(
        k4, (batch, num_latent), dtype=jnp.float32)
    # Per-dimension KL(q(z|x) || N(0, I)), shape [num_latent].
    kl = 0.5 * jnp.mean(
        jnp.square(z_mean) + jnp.exp(z_logvar) - z_logvar - 1.0, axis=0)

    stage_steps, beta_min, beta_max = 100, 1.0, 10.0
    module = CascadeVAEC(stage_steps=stage_steps,
                         beta_min=beta_min, beta_max=beta_max)

    ok = True
    for global_step in (0, 350, 10_000):   # stage = 0, 3, capped at num_latent-1
        model = _ModelStub(num_latent, global_step)
        out = module(data_batch, model, kl, z_mean, z_logvar, z_sampled)
        out = jax.block_until_ready(out)
        ref = _reference_forward(stage_steps, beta_min, beta_max,
                                 global_step, num_latent, kl)
        if not bool(jnp.abs(out - ref) <= 1e-5 * (1.0 + jnp.abs(ref))):
            ok = False

    if ok:
        print("KERNEL_OK")
</pallas_src>

<mosaic_0001>
module attributes {stable_mosaic.version = 11 : i64} {
  func.func @_cascade_vae_c_kernel(%arg0: i32, %arg1: memref<1xi32, #tpu.memory_space<smem>>, %arg2: memref<1x128xf32, #tpu.memory_space<vmem>>, %arg3: memref<1x1xf32, #tpu.memory_space<smem>>) attributes {dimension_semantics = [#tpu.dimension_semantics<arbitrary>], iteration_bounds = array<i64: 1>, scalar_prefetch = 1 : i64, scratch_operands = 0 : i64, tpu.core_type = #tpu.core_type<tc>, window_params = [{transform_indices = @transform_0, window_bounds = array<i64: 1, 128>}, {transform_indices = @transform_1, window_bounds = array<i64: 1, 1>}]} {
    %c0_i32 = arith.constant 0 : i32
    %0 = arith.cmpi eq, %arg0, %c0_i32 : i32
    %1 = arith.extui %0 : i1 to i32
    %c0_i32_0 = arith.constant 0 : i32
    %2 = arith.cmpi ne, %1, %c0_i32_0 : i32
    scf.if %2 {
      %cst_9 = arith.constant 0.000000e+00 : f32
      %c0_10 = arith.constant 0 : index
      %c0_11 = arith.constant 0 : index
      %22 = memref.load %arg3[%c0_10, %c0_11] : memref<1x1xf32, #tpu.memory_space<smem>>
      memref.store %cst_9, %arg3[%c0_10, %c0_11] : memref<1x1xf32, #tpu.memory_space<smem>>
    } else {
    }
    %c0 = arith.constant 0 : index
    %3 = memref.load %arg1[%c0] : memref<1xi32, #tpu.memory_space<smem>>
    %c0_1 = arith.constant 0 : index
    %c0_2 = arith.constant 0 : index
    %4 = vector.load %arg2[%c0_1, %c0_2] : memref<1x128xf32, #tpu.memory_space<vmem>>, vector<1x128xf32>
    %c128_i32 = arith.constant 128 : i32
    %5 = arith.muli %arg0, %c128_i32 : i32
    %6 = tpu.iota {dimensions = array<i32: 1>} : vector<1x128xi32>
    %7 = vector.broadcast %5 : i32 to vector<1x128xi32>
    %8 = arith.addi %7, %6 : vector<1x128xi32>
    %9 = vector.broadcast %3 : i32 to vector<1x128xi32>
    %10 = arith.cmpi sle, %8, %9 : vector<1x128xi32>
    %cst = arith.constant 1.000000e+00 : f32
    %cst_3 = arith.constant 1.000000e+01 : f32
    %11 = vector.broadcast %cst : f32 to vector<1x128xf32>
    %12 = vector.broadcast %cst_3 : f32 to vector<1x128xf32>
    %13 = arith.select %10, %11, %12 : vector<1x128xi1>, vector<1x128xf32>
    %c0_4 = arith.constant 0 : index
    %c0_5 = arith.constant 0 : index
    %14 = memref.load %arg3[%c0_4, %c0_5] : memref<1x1xf32, #tpu.memory_space<smem>>
    %15 = arith.mulf %13, %4 : vector<1x128xf32>
    %16 = vector.shape_cast %15 : vector<1x128xf32> to vector<1x1x128xf32>
    %cst_6 = arith.constant dense<0.000000e+00> : vector<1xf32>
    %17 = vector.multi_reduction <add>, %16, %cst_6 [1, 2] : vector<1x1x128xf32> to vector<1xf32>
    %18 = vector.shape_cast %17 : vector<1xf32> to vector<1x1x1xf32>
    %19 = vector.extract %18[0, 0, 0] : f32 from vector<1x1x1xf32>
    %20 = arith.addf %14, %19 : f32
    %c0_7 = arith.constant 0 : index
    %c0_8 = arith.constant 0 : index
    %21 = memref.load %arg3[%c0_7, %c0_8] : memref<1x1xf32, #tpu.memory_space<smem>>
    memref.store %20, %arg3[%c0_7, %c0_8] : memref<1x1xf32, #tpu.memory_space<smem>>
    return
  }
  func.func @transform_0(%arg0: i32, %arg1: memref<1xi32, #tpu.memory_space<smem>>) -> (i32, i32) {
    %c0_i32 = arith.constant 0 : i32
    %c0_i32_0 = arith.constant 0 : i32
    return %c0_i32, %arg0 : i32, i32
  }
  func.func @transform_1(%arg0: i32, %arg1: memref<1xi32, #tpu.memory_space<smem>>) -> (i32, i32) {
    %c0_i32 = arith.constant 0 : i32
    %c0_i32_0 = arith.constant 0 : i32
    %c0_i32_1 = arith.constant 0 : i32
    return %c0_i32, %c0_i32_0 : i32, i32
  }
}

</mosaic_0001>

<llo_original>
// kernel: tpu_custom_call.1
$region0: #{tpu_custom_call.1}
  #allocation0 [shape = 'u32[]', space=smem, size = 0x4, offset = 0x4, fixed_abs, tag = 'smem constant byte address 0x4 - core index']
  #allocation1 [shape = 'u32[144,128]{1,0:T(1,128)}', space=vmem, size = 0x12000, scoped, tag = 'internal scratch']
  #allocation2 [shape = 's32[1]{0}', space=sflag, size = 0x4, scoped, tag = 'scoped memory for tpu_custom_call.1']
  #allocation3 [shape = 's32[1]{0:T(128)S(6)}', space=smem, size = 0x200, scoped, tag = 'prefetched SMEM operand 0']
  %s0 = inlined_call_operand.<no memory space> [shape: s32[1], index: 0, kind: input, shape index: {}]
  %s1 = inlined_call_operand.vmem [shape: f32[1,128], index: 1, kind: input, shape index: {}]
  %s2 = inlined_call_operand.hbm [shape: f32[1,1], index: 2, kind: output, shape index: {}]
  %s3 = sld [smem:[#allocation0]]
  $region18: #{tpu_custom_call.1} parent=0
    _
  %s5 = ssub.s32 1, %s3
  %s6 = scalar_select 0, %s5, %s3
  %7 = sst [smem:[#allocation3]] %s0
  $region1: #{tpu_custom_call.1} parent=0
    #allocation4 [shape = 'u8[512]{0}', space=smem, size = 0x200, scoped, tag = 'output window, operand 0, single buffered']
    #allocation5 [shape = 's32[1]{0}', space=sflag, size = 0x4, scoped, tag = 'scoped memory for tpu_custom_call.1']
    %8 = vsyncpa [#allocation5], 0
    // Predicated region
    $region2: #{tpu_custom_call.1} parent=1 // pred_check
      _
    $region3: #{tpu_custom_call.1} parent=1 // pred_check_branch
      %10 = sbr.rel (0) target = $region5
    $region4: #{tpu_custom_call.1} parent=1 // pred_region
      _
    $region5: #{tpu_custom_call.1} parent=1 // pred_fallthru
      _
    %p11 = scmp.eq.s32.totalorder 0, 0
    // Predicated region
    $region6: #{tpu_custom_call.1} parent=1 // pred_check
      %p12 = pneg %p11
    $region7: #{tpu_custom_call.1} parent=1 // pred_check_branch
      %14 = sbr.rel (%p12) target = $region9
    $region8: #{tpu_custom_call.1} parent=1 // pred_region
      %s15 = scalar_lea.smem [#allocation4], 0
      %16 = sst [smem:[%s15]] 0.0
    $region9: #{tpu_custom_call.1} parent=1 // pred_fallthru
      _
    %s17 = sld [smem:[#allocation3]]
    %v18 = vld [vmem:[%s1] sm:$0x1]
    %s19 = smul.u32 0, 128
    %v20 = vlaneseq
    %v21 = vand.u32 %v20, 127
    %v22 = vstv %s19
    %v23 = vadd.s32 %v22, %v21
    %v24 = vstv %s17
    %vm25 = vcmp.le.s32.totalorder %v23, %v24
    %v26 = vsel %vm25, 1.0, 10.0
    %s27 = sld [smem:[#allocation4]]
    %v28 = vmul.f32 %v26, %v18
    %vm29 = vcmask 1040384
    %v30 = vsel %vm29, %v28, 0.0
    %31 = vadd.xlane.f32.xlu0 %v30
    %v32 = vpop.xlane.xlu0 %31
    %v33 = vrot.slane %v32, 4
    %v34 = vadd.f32 %v32, %v33
    %v35 = vrot.slane %v34, 2
    %v36 = vadd.f32 %v34, %v35
    %v37 = vrot.slane %v36, 1
    %v38 = vadd.f32 %v36, %v37
    %s39 = vtos %v38
    %s40 = sadd.f32 %s27, %s39
    %s41 = scalar_lea.smem [#allocation4], 0
    %42 = sst [smem:[%s41]] %s40
    // Predicated region
    $region10: #{tpu_custom_call.1} parent=1 // pred_check
      _
    $region11: #{tpu_custom_call.1} parent=1 // pred_check_branch
      %44 = sbr.rel (0) target = $region13
    $region12: #{tpu_custom_call.1} parent=1 // pred_region
      %s46 = ssub.s32 16, 16
      %47 = vsyncadd [#allocation5], %s46
      %50 = dma.smem_to_hbm [#allocation4], 16, %s2, [#allocation5]
    $region13: #{tpu_custom_call.1} parent=1 // pred_fallthru
      _
    // Predicated region
    $region14: #{tpu_custom_call.1} parent=1 // pred_check
      _
    $region15: #{tpu_custom_call.1} parent=1 // pred_check_branch
      %52 = sbr.rel (0) target = $region17
    $region16: #{tpu_custom_call.1} parent=1 // pred_region
      %53 = dma.done [#allocation5], 16
    $region17: #{tpu_custom_call.1} parent=1 // pred_fallthru
      _
    %54 = sfence
    %55 = vsyncpa [#allocation5], 1

</llo_original>
